<compile_context>
chip_gen: v7x
topology: tpu7x:2x2x1
jax: 0.10.0
libtpu: 0.0.40
codegen_flags: <defaults>
</compile_context>

<pallas_src>
import functools

import jax
import jax.numpy as jnp
from jax.experimental import pallas as pl
from jax.experimental.pallas import tpu as pltpu

_LANE = 128
_SUBLANE = 8
_NEG = -1e30  # additive mask value for invalid time positions


def _round_up(x, m):
    return (x + m - 1) // m * m


# ----------------------------------------------------------------------------
# Fused kernel: wide packed conv + tap-roll + mask + max-pool + ReLU + fc + sigmoid
# ----------------------------------------------------------------------------
def _textcnn_fused_kernel(x_ref, w_ref, cb_ref, mask_ref, fw_ref, fb_ref,
                          o_ref, *, k_max, tb, s_pad, fp):
    # x_ref   : (TB, S_pad, H)    f32   encoder output tile (cast to bf16 here)
    # w_ref   : (H, K_max*Fp)     bf16  tap j occupies lanes [j*Fp, (j+1)*Fp)
    # cb_ref  : (1, Fp)           f32   packed conv biases (pad columns = 0)
    # mask_ref: (S_pad, Fp)       f32   0 on valid positions, -1e30 otherwise
    # fw_ref  : (Fp, Cp)          f32   zero-padded fc weight
    # fb_ref  : (1, Cp)           f32   zero-padded fc bias
    # o_ref   : (TB, Cp)          f32   sigmoid(fc(features)), lane-dense
    ltot = tb * s_pad
    h = x_ref.shape[2]
    x = x_ref[...].reshape(ltot, h).astype(jnp.bfloat16)      # (Ltot, H)

    # ONE wide MXU matmul over all taps (fills a 256-wide MXU on v6e/v7x).
    y = jnp.dot(x, w_ref[...], preferred_element_type=jnp.float32)

    # Tap-shift each 128-lane result slab via XLU roll and accumulate.
    # Columns whose filter size <= j have zero weights at tap j, so roll
    # wraparound only ever lands on positions that the additive mask removes.
    acc = y[:, :fp]
    for j in range(1, k_max):
        slab = y[:, j * fp:(j + 1) * fp]
        acc = acc + pltpu.roll(slab, shift=ltot - j, axis=0)   # out[t]=slab[t+j]

    # Additive validity mask, then max-pool over time per batch row.
    acc3 = acc.reshape(tb, s_pad, fp)
    pooled = jnp.max(acc3 + mask_ref[...][None, :, :], axis=1)   # (TB, Fp)

    # Bias + ReLU after the pool (bias is time-invariant, ReLU is monotone).
    feat = jnp.maximum(pooled + cb_ref[...], 0.0)

    # Fused fc + sigmoid; dropout is identity in eval mode.
    logits = jnp.dot(feat, fw_ref[...],
                     preferred_element_type=jnp.float32) + fb_ref[...]
    o_ref[...] = pl.reciprocal(1.0 + jnp.exp(-logits), approx=True)


def _vmem_estimate(tb, s_pad, H, k_max, fp, cp):
    """Conservative per-step VMEM footprint estimate (bytes)."""
    ltot = tb * s_pad
    x_io = 2 * ltot * H * 4                                    # dbl-buffered f32 tile
    resident = 2 * (H * k_max * fp * 2 + s_pad * fp * 4
                    + fp * (1 + cp) * 4 + cp * 4)              # weights / masks
    tmp = (ltot * H * 2                                        # bf16 x copy
           + ltot * k_max * fp * 4                             # wide y
           + 2 * ltot * fp * 4)                                # acc (+ masked copy)
    out = 2 * tb * cp * 4
    return x_io + resident + tmp + out


# ----------------------------------------------------------------------------
# TextCNN head wrapper
# ----------------------------------------------------------------------------
def bert_cnn_head(encoder_out, conv_ws, conv_bs, filter_sizes, fc_w, fc_b,
                  *, block_b=16):
    """encoder_out: (B,S,H) f32 -> sigmoid(fc(concat_i maxpool(relu(conv_i))))."""
    B, S, H = encoder_out.shape
    num_f = conv_ws[0].shape[-1]
    n_groups = len(filter_sizes)
    C = fc_w.shape[1]
    k_max = max(filter_sizes)
    d = num_f * n_groups

    fp = _round_up(d, _LANE)            # lane-dense packed filter dimension
    cp = _round_up(C, _LANE)            # lane-dense output dimension
    s_pad = _round_up(S, _SUBLANE)      # f32 sublane alignment for flatten

    # ---- pack all (group, tap) weight blocks along the lane axis ------------
    # TODO(synk): v5e-only zero-column trimming (drop tap blocks with k<k_max)
    # not implemented; the wide-RHS layout keeps the masking proof simple.
    w_wide = jnp.zeros((H, k_max * fp), jnp.float32)
    cb = jnp.zeros((1, fp), jnp.float32)
    valid_len = jnp.full((fp,), s_pad, jnp.int32)   # pad cols: all valid (harmless)
    for g, (k, w, b) in enumerate(zip(filter_sizes, conv_ws, conv_bs)):
        c0 = g * num_f
        for j in range(k):
            w_wide = w_wide.at[:, j * fp + c0:j * fp + c0 + num_f].set(w[j])
        cb = cb.at[0, c0:c0 + num_f].set(b)
        valid_len = valid_len.at[c0:c0 + num_f].set(S - k + 1)
    pos = jnp.arange(s_pad, dtype=jnp.int32)[:, None]
    mask = jnp.where(pos < valid_len[None, :], 0.0, _NEG).astype(jnp.float32)

    fw = jnp.zeros((fp, cp), jnp.float32).at[:d, :C].set(fc_w)
    fb = jnp.zeros((1, cp), jnp.float32).at[0, :C].set(fc_b)

    # ---- batch tiling --------------------------------------------------------
    tb = min(block_b, B)
    budget = 44 * 2 ** 20                       # fits v7x's 64 MiB VMEM
    while tb > 8 and _vmem_estimate(tb, s_pad, H, k_max, fp, cp) > budget:
        tb = max(8, tb // 2)
    # Prefer >=2 grid steps (v7x has 2 TensorCores) when the halved tile stays
    # sublane-aligned for the (tb, Cp) output block.
    if B // tb < 2 and tb >= 16:
        tb //= 2

    b_pad = _round_up(B, tb)
    x = encoder_out
    if (b_pad, s_pad) != (B, S):
        # Only materializes when B/S are not tile-aligned; at BERT sizes
        # (S a multiple of 8) this path is not taken.
        x = jnp.pad(x, ((0, b_pad - B), (0, s_pad - S), (0, 0)))

    grid = (b_pad // tb,)
    kern = functools.partial(_textcnn_fused_kernel, k_max=k_max, tb=tb,
                             s_pad=s_pad, fp=fp)

    cparams = dict(dimension_semantics=("parallel",))
    est = _vmem_estimate(tb, s_pad, H, k_max, fp, cp)
    if est > 30 * 2 ** 20:
        cparams["vmem_limit_bytes"] = int(min(64 * 2 ** 20, est + (8 << 20)))

    out = pl.pallas_call(
        kern,
        out_shape=jax.ShapeDtypeStruct((b_pad, cp), jnp.float32),
        grid_spec=pltpu.PrefetchScalarGridSpec(
            num_scalar_prefetch=0,
            grid=grid,
            in_specs=[
                pl.BlockSpec((tb, s_pad, H), lambda i: (i, 0, 0)),     # x (f32)
                pl.BlockSpec((H, k_max * fp), lambda i: (0, 0)),       # wide conv W
                pl.BlockSpec((1, fp), lambda i: (0, 0)),               # conv bias
                pl.BlockSpec((s_pad, fp), lambda i: (0, 0)),           # additive mask
                pl.BlockSpec((fp, cp), lambda i: (0, 0)),              # fc weight
                pl.BlockSpec((1, cp), lambda i: (0, 0)),               # fc bias
            ],
            out_specs=pl.BlockSpec((tb, cp), lambda i: (i, 0)),
        ),
        compiler_params=pltpu.CompilerParams(**cparams),
    )(x, w_wide.astype(jnp.bfloat16), cb, mask, fw, fb)

    return out[:B, :C]


# ----------------------------------------------------------------------------
# Model wrapper (frozen BERT encoder stubbed by an embedding lookup)
# ----------------------------------------------------------------------------
class ModelParams:
    def __init__(self, key, vocab_size, hidden_size, num_filters,
                 filter_sizes, num_classes):
        ks = jax.random.split(key, 2 + 2 * len(filter_sizes) + 2)
        i = 0
        # deterministic stand-in for the frozen BERT encoder: embedding table
        self.embed = 0.02 * jax.random.normal(
            ks[i], (vocab_size, hidden_size), jnp.float32); i += 1
        self.conv_w = []
        self.conv_b = []
        for k in filter_sizes:
            # PyTorch Conv2d weight (F, 1, k, H) -> stored as (k, H, F)
            w = 0.1 * jax.random.normal(
                ks[i], (k, hidden_size, num_filters), jnp.float32); i += 1
            b = 0.1 * jax.random.normal(ks[i], (num_filters,), jnp.float32); i += 1
            self.conv_w.append(w)
            self.conv_b.append(b)
        d = num_filters * len(filter_sizes)
        self.fc_w = 0.1 * jax.random.normal(
            ks[i], (d, num_classes), jnp.float32); i += 1
        self.fc_b = 0.1 * jax.random.normal(ks[i], (num_classes,), jnp.float32)


def model_forward(params, context, mask, filter_sizes):
    # TODO(synk): BertModel(context, attention_mask=mask) replaced by an
    # embedding lookup; mask is accepted but unused in this stub encoder
    # (the original model also does not mask the max-pool over time).
    encoder_out = params.embed[context]                     # (B, S, H) f32
    return bert_cnn_head(encoder_out, params.conv_w, params.conv_b,
                         filter_sizes, params.fc_w, params.fc_b)


# ----------------------------------------------------------------------------
# Pure-JAX f32 reference (for correctness checking)
# ----------------------------------------------------------------------------
def reference_forward(params, context, filter_sizes):
    x = params.embed[context]                               # (B, S, H)
    S = x.shape[1]
    feats = []
    for k, w, b in zip(filter_sizes, params.conv_w, params.conv_b):
        L = S - k + 1
        conv = jnp.zeros((x.shape[0], L, w.shape[-1]), jnp.float32)
        for j in range(k):
            conv = conv + jnp.einsum('bsh,hf->bsf', x[:, j:j + L, :], w[j])
        conv = jax.nn.relu(conv + b[None, None, :])
        feats.append(jnp.max(conv, axis=1))
    feat = jnp.concatenate(feats, axis=1)
    return jax.nn.sigmoid(feat @ params.fc_w + params.fc_b)


if __name__ == "__main__":
    B, S, H = 2, 16, 32
    vocab_size = 64
    num_filters = 10
    filter_sizes = (2, 3, 4)
    num_classes = 4

    key = jax.random.PRNGKey(0)
    kp, kc = jax.random.split(key)
    params = ModelParams(kp, vocab_size, H, num_filters,
                         filter_sizes, num_classes)

    context = jax.random.randint(kc, (B, S), 0, vocab_size, dtype=jnp.int32)
    mask = jnp.ones((B, S), dtype=jnp.int32)

    out = model_forward(params, context, mask, filter_sizes)
    out = jax.block_until_ready(out)
    assert out.shape == (B, num_classes)
    assert bool(jnp.all(jnp.isfinite(out)))

    ref = reference_forward(params, context, filter_sizes)
    assert bool(jnp.allclose(out, ref, atol=2e-2, rtol=2e-2)), (out, ref)

    print("KERNEL_OK")
</pallas_src>

<mosaic_0001>
module attributes {stable_mosaic.version = 11 : i64} {
  func.func @_textcnn_fused_kernel(%arg0: i32, %arg1: memref<2x16x32xf32, #tpu.memory_space<vmem>>, %arg2: memref<32x512xbf16, #tpu.memory_space<vmem>>, %arg3: memref<1x128xf32, #tpu.memory_space<vmem>>, %arg4: memref<16x128xf32, #tpu.memory_space<vmem>>, %arg5: memref<128x128xf32, #tpu.memory_space<vmem>>, %arg6: memref<1x128xf32, #tpu.memory_space<vmem>>, %arg7: memref<2x128xf32, #tpu.memory_space<vmem>>) attributes {dimension_semantics = [#tpu.dimension_semantics<parallel>], iteration_bounds = array<i64: 1>, scalar_prefetch = 0 : i64, scratch_operands = 0 : i64, tpu.core_type = #tpu.core_type<tc>, window_params = [{transform_indices = @transform_0, window_bounds = array<i64: 2, 16, 32>}, {pipeline_mode = #tpu.pipeline_mode<synchronous>, transform_indices = @transform_1, window_bounds = array<i64: 32, 512>}, {pipeline_mode = #tpu.pipeline_mode<synchronous>, transform_indices = @transform_2, window_bounds = array<i64: 1, 128>}, {pipeline_mode = #tpu.pipeline_mode<synchronous>, transform_indices = @transform_3, window_bounds = array<i64: 16, 128>}, {pipeline_mode = #tpu.pipeline_mode<synchronous>, transform_indices = @transform_4, window_bounds = array<i64: 128, 128>}, {pipeline_mode = #tpu.pipeline_mode<synchronous>, transform_indices = @transform_5, window_bounds = array<i64: 1, 128>}, {transform_indices = @transform_6, window_bounds = array<i64: 2, 128>}]} {
    %c0 = arith.constant 0 : index
    %c0_0 = arith.constant 0 : index
    %c0_1 = arith.constant 0 : index
    %0 = vector.load %arg1[%c0, %c0_0, %c0_1] : memref<2x16x32xf32, #tpu.memory_space<vmem>>, vector<2x16x32xf32>
    %1 = vector.shape_cast %0 : vector<2x16x32xf32> to vector<32x32xf32>
    %2 = arith.truncf %1 : vector<32x32xf32> to vector<32x32xbf16>
    %c0_2 = arith.constant 0 : index
    %c0_3 = arith.constant 0 : index
    %3 = vector.load %arg2[%c0_2, %c0_3] : memref<32x512xbf16, #tpu.memory_space<vmem>>, vector<32x512xbf16>
    %cst = arith.constant dense<0.000000e+00> : vector<32x512xf32>
    %4 = tpu.matmul %2, %3, %cst {dimension_numbers = #tpu.dot_dimension_numbers<[1], [0], [0], [1], [0, 0, 1, 1], [], []>} : vector<32x32xbf16>, vector<32x512xbf16>, vector<32x512xf32> -> vector<32x512xf32>
    %5 = vector.extract_strided_slice %4 {offsets = [0, 0], sizes = [32, 128], strides = [1, 1]} : vector<32x512xf32> to vector<32x128xf32>
    %6 = vector.extract_strided_slice %4 {offsets = [0, 128], sizes = [32, 128], strides = [1, 1]} : vector<32x512xf32> to vector<32x128xf32>
    %c31_i32 = arith.constant 31 : i32
    %7 = tpu.dynamic_rotate %6 by %c31_i32 dim 0 : vector<32x128xf32>, i32 -> vector<32x128xf32>
    %8 = arith.addf %5, %7 : vector<32x128xf32>
    %9 = vector.extract_strided_slice %4 {offsets = [0, 256], sizes = [32, 128], strides = [1, 1]} : vector<32x512xf32> to vector<32x128xf32>
    %c30_i32 = arith.constant 30 : i32
    %10 = tpu.dynamic_rotate %9 by %c30_i32 dim 0 : vector<32x128xf32>, i32 -> vector<32x128xf32>
    %11 = arith.addf %8, %10 : vector<32x128xf32>
    %12 = vector.extract_strided_slice %4 {offsets = [0, 384], sizes = [32, 128], strides = [1, 1]} : vector<32x512xf32> to vector<32x128xf32>
    %c29_i32 = arith.constant 29 : i32
    %13 = tpu.dynamic_rotate %12 by %c29_i32 dim 0 : vector<32x128xf32>, i32 -> vector<32x128xf32>
    %14 = arith.addf %11, %13 : vector<32x128xf32>
    %15 = vector.shape_cast %14 : vector<32x128xf32> to vector<2x16x128xf32>
    %c0_4 = arith.constant 0 : index
    %c0_5 = arith.constant 0 : index
    %16 = vector.load %arg4[%c0_4, %c0_5] : memref<16x128xf32, #tpu.memory_space<vmem>>, vector<16x128xf32>
    %17 = vector.shape_cast %16 : vector<16x128xf32> to vector<1x16x128xf32>
    %18 = vector.broadcast %17 : vector<1x16x128xf32> to vector<2x16x128xf32>
    %19 = arith.addf %15, %18 : vector<2x16x128xf32>
    %cst_6 = arith.constant dense<0xFF800000> : vector<2x128xf32>
    %20 = vector.multi_reduction <maximumf>, %19, %cst_6 [1] : vector<2x16x128xf32> to vector<2x128xf32>
    %c0_7 = arith.constant 0 : index
    %c0_8 = arith.constant 0 : index
    %21 = vector.load %arg3[%c0_7, %c0_8] : memref<1x128xf32, #tpu.memory_space<vmem>>, vector<1x128xf32>
    %22 = vector.broadcast %21 : vector<1x128xf32> to vector<2x128xf32>
    %23 = arith.addf %20, %22 : vector<2x128xf32>
    %cst_9 = arith.constant 0.000000e+00 : f32
    %24 = vector.broadcast %cst_9 : f32 to vector<2x128xf32>
    %25 = arith.maximumf %23, %24 : vector<2x128xf32>
    %c0_10 = arith.constant 0 : index
    %c0_11 = arith.constant 0 : index
    %26 = vector.load %arg5[%c0_10, %c0_11] : memref<128x128xf32, #tpu.memory_space<vmem>>, vector<128x128xf32>
    %cst_12 = arith.constant dense<0.000000e+00> : vector<2x128xf32>
    %27 = tpu.matmul %25, %26, %cst_12 {dimension_numbers = #tpu.dot_dimension_numbers<[1], [0], [0], [1], [0, 0, 1, 1], [], []>} : vector<2x128xf32>, vector<128x128xf32>, vector<2x128xf32> -> vector<2x128xf32>
    %c0_13 = arith.constant 0 : index
    %c0_14 = arith.constant 0 : index
    %28 = vector.load %arg6[%c0_13, %c0_14] : memref<1x128xf32, #tpu.memory_space<vmem>>, vector<1x128xf32>
    %29 = vector.broadcast %28 : vector<1x128xf32> to vector<2x128xf32>
    %30 = arith.addf %27, %29 : vector<2x128xf32>
    %cst_15 = arith.constant 0.000000e+00 : f32
    %31 = vector.broadcast %cst_15 : f32 to vector<2x128xf32>
    %32 = arith.subf %31, %30 : vector<2x128xf32>
    %33 = math.exp %32 : vector<2x128xf32>
    %cst_16 = arith.constant 1.000000e+00 : f32
    %34 = vector.broadcast %cst_16 : f32 to vector<2x128xf32>
    %35 = arith.addf %34, %33 : vector<2x128xf32>
    %36 = tpu.reciprocal %35 {approx = true} : vector<2x128xf32> -> vector<2x128xf32>
    %c0_17 = arith.constant 0 : index
    %c0_18 = arith.constant 0 : index
    %37 = vector.load %arg7[%c0_17, %c0_18] : memref<2x128xf32, #tpu.memory_space<vmem>>, vector<2x128xf32>
    tpu.vector_store %arg7[%c0_17, %c0_18], %36 {strides = array<i32>} : memref<2x128xf32, #tpu.memory_space<vmem>>, vector<2x128xf32>,
    return
  }
  func.func @transform_0(%arg0: i32) -> (i32, i32, i32) {
    %c0_i32 = arith.constant 0 : i32
    %c0_i32_0 = arith.constant 0 : i32
    %c0_i32_1 = arith.constant 0 : i32
    return %arg0, %c0_i32, %c0_i32_0 : i32, i32, i32
  }
  func.func @transform_1(%arg0: i32) -> (i32, i32) {
    %c0_i32 = arith.constant 0 : i32
    %c0_i32_0 = arith.constant 0 : i32
    %c0_i32_1 = arith.constant 0 : i32
    return %c0_i32, %c0_i32_0 : i32, i32
  }
  func.func @transform_2(%arg0: i32) -> (i32, i32) {
    %c0_i32 = arith.constant 0 : i32
    %c0_i32_0 = arith.constant 0 : i32
    %c0_i32_1 = arith.constant 0 : i32
    return %c0_i32, %c0_i32_0 : i32, i32
  }
  func.func @transform_3(%arg0: i32) -> (i32, i32) {
    %c0_i32 = arith.constant 0 : i32
    %c0_i32_0 = arith.constant 0 : i32
    %c0_i32_1 = arith.constant 0 : i32
    return %c0_i32, %c0_i32_0 : i32, i32
  }
  func.func @transform_4(%arg0: i32) -> (i32, i32) {
    %c0_i32 = arith.constant 0 : i32
    %c0_i32_0 = arith.constant 0 : i32
    %c0_i32_1 = arith.constant 0 : i32
    return %c0_i32, %c0_i32_0 : i32, i32
  }
  func.func @transform_5(%arg0: i32) -> (i32, i32) {
    %c0_i32 = arith.constant 0 : i32
    %c0_i32_0 = arith.constant 0 : i32
    %c0_i32_1 = arith.constant 0 : i32
    return %c0_i32, %c0_i32_0 : i32, i32
  }
  func.func @transform_6(%arg0: i32) -> (i32, i32) {
    %c0_i32 = arith.constant 0 : i32
    %c0_i32_0 = arith.constant 0 : i32
    return %arg0, %c0_i32 : i32, i32
  }
}

</mosaic_0001>

<llo_original>
// kernel: tpu_custom_call.1
$region0: #{tpu_custom_call.1}
  #allocation0 [shape = 'u32[]', space=smem, size = 0x4, offset = 0x4, fixed_abs, tag = 'smem constant byte address 0x4 - core index']
  #allocation1 [shape = 'u32[144,128]{1,0:T(1,128)}', space=vmem, size = 0x12000, scoped, tag = 'internal scratch']
  %s0 = inlined_call_operand.hbm [shape: f32[2,16,32], index: 0, kind: input, shape index: {}]
  %s1 = inlined_call_operand.hbm [shape: bf16[32,512], index: 1, kind: input, shape index: {}]
  %s2 = inlined_call_operand.vmem [shape: f32[1,128], index: 2, kind: input, shape index: {}]
  %s3 = inlined_call_operand.hbm [shape: f32[16,128], index: 3, kind: input, shape index: {}]
  %s4 = inlined_call_operand.hbm [shape: f32[128,128], index: 4, kind: input, shape index: {}]
  %s5 = inlined_call_operand.vmem [shape: f32[1,128], index: 5, kind: input, shape index: {}]
  %s6 = inlined_call_operand.hbm [shape: f32[2,128], index: 6, kind: output, shape index: {}]
  %s7 = sld [smem:[#allocation0]]
  $region50: #{tpu_custom_call.1} parent=0
    _
  %s9 = ssub.s32 1, %s7
  %s10 = scalar_select 0, %s9, %s7
  $region1: #{tpu_custom_call.1} parent=0
    #allocation2 [shape = 'u8[16384]{0}', space=vmem, size = 0x4000, scoped, tag = 'input window, operand 0, single buffered']
    #allocation3 [shape = 's32[1]{0}', space=sflag, size = 0x4, scoped, tag = 'scoped memory for tpu_custom_call.1']
    #allocation4 [shape = 's32[1]{0}', space=sflag, size = 0x4, scoped, tag = 'scoped memory for tpu_custom_call.1']
    #allocation5 [shape = 'u8[32768]{0}', space=vmem, size = 0x8000, scoped, tag = 'input window, operand 1, single buffered']
    #allocation6 [shape = 's32[1]{0}', space=sflag, size = 0x4, scoped, tag = 'scoped memory for tpu_custom_call.1']
    #allocation7 [shape = 'u8[8192]{0}', space=vmem, size = 0x2000, scoped, tag = 'input window, operand 3, single buffered']
    #allocation8 [shape = 'u8[65536]{0}', space=vmem, size = 0x10000, scoped, tag = 'input window, operand 4, single buffered']
    #allocation9 [shape = 's32[1]{0}', space=sflag, size = 0x4, scoped, tag = 'scoped memory for tpu_custom_call.1']
    #allocation10 [shape = 'u8[1024]{0}', space=vmem, size = 0x400, scoped, tag = 'output window, operand 0, single buffered']
    %11 = vsyncpa [#allocation3], 0
    %12 = vsyncpa [#allocation6], 0
    %13 = vsyncpa [#allocation9], 0
    %14 = vsyncpa [#allocation4], 0
    // Predicated region
    $region2: #{tpu_custom_call.1} parent=1 // pred_check
      _
    $region3: #{tpu_custom_call.1} parent=1 // pred_check_branch
      %16 = sbr.rel (0) target = $region5
    $region4: #{tpu_custom_call.1} parent=1 // pred_region
      %s18 = ssub.s32 512, 512
      %19 = vsyncadd [#allocation3], %s18
      %s20 = sshll.u32 [#allocation2], 4
      %s21 = int_to_ptr.vmem [resolvable:$true] %s20
      %26 = dma.hbm_to_vmem [thread:$0]  %s0, 512, %s21, [#allocation3], 128, 128, 8
    $region5: #{tpu_custom_call.1} parent=1 // pred_fallthru
      _
    // Predicated region
    $region6: #{tpu_custom_call.1} parent=1 // pred_check
      _
    $region7: #{tpu_custom_call.1} parent=1 // pred_check_branch
      %28 = sbr.rel (0) target = $region9
    $region8: #{tpu_custom_call.1} parent=1 // pred_region
      %s30 = ssub.s32 1024, 1024
      %31 = vsyncadd [#allocation6], %s30
      %s32 = sshll.u32 [#allocation5], 4
      %s33 = int_to_ptr.vmem [resolvable:$true] %s32
      %38 = dma.hbm_to_vmem [thread:$0]  %s1, 1024, %s33, [#allocation6], 256, 256, 16
    $region9: #{tpu_custom_call.1} parent=1 // pred_fallthru
      _
    // Predicated region
    $region10: #{tpu_custom_call.1} parent=1 // pred_check
      _
    $region11: #{tpu_custom_call.1} parent=1 // pred_check_branch
      %40 = sbr.rel (0) target = $region13
    $region12: #{tpu_custom_call.1} parent=1 // pred_region
      _
    $region13: #{tpu_custom_call.1} parent=1 // pred_fallthru
      _
    // Predicated region
    $region14: #{tpu_custom_call.1} parent=1 // pred_check
      _
    $region15: #{tpu_custom_call.1} parent=1 // pred_check_branch
      %42 = sbr.rel (0) target = $region17
    $region16: #{tpu_custom_call.1} parent=1 // pred_region
      %s44 = ssub.s32 256, 256
      %45 = vsyncadd [#allocation6], %s44
      %s46 = sshll.u32 [#allocation7], 4
      %s47 = int_to_ptr.vmem [resolvable:$true] %s46
      %52 = dma.hbm_to_vmem [thread:$0]  %s3, 256, %s47, [#allocation6], 128, 128, 8
    $region17: #{tpu_custom_call.1} parent=1 // pred_fallthru
      _
    // Predicated region
    $region18: #{tpu_custom_call.1} parent=1 // pred_check
      _
    $region19: #{tpu_custom_call.1} parent=1 // pred_check_branch
      %54 = sbr.rel (0) target = $region21
    $region20: #{tpu_custom_call.1} parent=1 // pred_region
      %s56 = ssub.s32 2048, 2048
      %57 = vsyncadd [#allocation9], %s56
      %s58 = sshll.u32 [#allocation8], 4
      %s59 = int_to_ptr.vmem [resolvable:$true] %s58
      %64 = dma.hbm_to_vmem [thread:$0]  %s4, 2048, %s59, [#allocation9], 128, 128, 8
    $region21: #{tpu_custom_call.1} parent=1 // pred_fallthru
      _
    // Predicated region
    $region22: #{tpu_custom_call.1} parent=1 // pred_check
      _
    $region23: #{tpu_custom_call.1} parent=1 // pred_check_branch
      %66 = sbr.rel (0) target = $region25
    $region24: #{tpu_custom_call.1} parent=1 // pred_region
      _
    $region25: #{tpu_custom_call.1} parent=1 // pred_fallthru
      _
    // Predicated region
    $region26: #{tpu_custom_call.1} parent=1 // pred_check
      _
    $region27: #{tpu_custom_call.1} parent=1 // pred_check_branch
      %68 = sbr.rel (0) target = $region29
    $region28: #{tpu_custom_call.1} parent=1 // pred_region
      %69 = dma.done [#allocation3], 512
    $region29: #{tpu_custom_call.1} parent=1 // pred_fallthru
      _
    // Predicated region
    $region30: #{tpu_custom_call.1} parent=1 // pred_check
      _
    $region31: #{tpu_custom_call.1} parent=1 // pred_check_branch
      %71 = sbr.rel (0) target = $region33
    $region32: #{tpu_custom_call.1} parent=1 // pred_region
      %72 = dma.done [#allocation6], 1024
    $region33: #{tpu_custom_call.1} parent=1 // pred_fallthru
      _
    // Predicated region
    $region34: #{tpu_custom_call.1} parent=1 // pred_check
      _
    $region35: #{tpu_custom_call.1} parent=1 // pred_check_branch
      %74 = sbr.rel (0) target = $region37
    $region36: #{tpu_custom_call.1} parent=1 // pred_region
      %75 = dma.done [#allocation6], 256
    $region37: #{tpu_custom_call.1} parent=1 // pred_fallthru
      _
    // Predicated region
    $region38: #{tpu_custom_call.1} parent=1 // pred_check
      _
    $region39: #{tpu_custom_call.1} parent=1 // pred_check_branch
      %77 = sbr.rel (0) target = $region41
    $region40: #{tpu_custom_call.1} parent=1 // pred_region
      %78 = dma.done [#allocation9], 2048
    $region41: #{tpu_custom_call.1} parent=1 // pred_fallthru
      _
    %v80 = vld [vmem:[#allocation2] sm:$0xff]
    %v81 = vld [vmem:[#allocation2 + $0x8] sm:$0xff]
    %v82 = vld [vmem:[#allocation2 + $0x10] sm:$0xff]
    %v83 = vld [vmem:[#allocation2 + $0x18] sm:$0xff]
    %v84 = vpack.c.bf16 %v81, %v80
    %v85 = vpack.c.bf16 %v83, %v82
    %v86 = vld [vmem:[#allocation5] sm:$0xff]
    %v87 = vld [vmem:[#allocation5 + $0x8] sm:$0xff]
    %v88 = vld [vmem:[#allocation5 + $0x10] sm:$0xff]
    %v89 = vld [vmem:[#allocation5 + $0x18] sm:$0xff]
    %v90 = vld [vmem:[#allocation5 + $0x20] sm:$0xff]
    %v91 = vld [vmem:[#allocation5 + $0x28] sm:$0xff]
    %v92 = vld [vmem:[#allocation5 + $0x30] sm:$0xff]
    %v93 = vld [vmem:[#allocation5 + $0x38] sm:$0xff]
    %v102 = vunpack.c.l.b16 %v86
    %v103 = vunpack.c.h.b16 %v86
    %v104 = vunpack.c.l.b16 %v87
    %v105 = vunpack.c.h.b16 %v87
    %v106 = vunpack.c.l.b16 %v88
    %v107 = vunpack.c.h.b16 %v88
    %v108 = vunpack.c.l.b16 %v89
    %v109 = vunpack.c.h.b16 %v89
    %v110 = vunpack.c.l.b16 %v90
    %v111 = vunpack.c.h.b16 %v90
    %v112 = vunpack.c.l.b16 %v91
    %v113 = vunpack.c.h.b16 %v91
    %v114 = vunpack.c.l.b16 %v92
    %v115 = vunpack.c.h.b16 %v92
    %v116 = vunpack.c.l.b16 %v93
    %v117 = vunpack.c.h.b16 %v93
    %v118 = vpack.c.b16 %v106, %v102
    %v119 = vpack.c.b16 %v107, %v103
    %v120 = vpack.c.b16 %v108, %v104
    %v121 = vpack.c.b16 %v109, %v105
    %v122 = vpack.c.b16 %v114, %v110
    %v123 = vpack.c.b16 %v115, %v111
    %v124 = vpack.c.b16 %v116, %v112
    %v125 = vpack.c.b16 %v117, %v113
    %vm134 = vcmask 261120
    %v136 = vsel %vm134, %v84, 0
    %v139 = vsel %vm134, %v85, 0
    %141 = vmatprep.subr.bf16.mxu0 %v119
    %142 = vmatpush1.bf16.msra.mxu0 %v118
    %143 = vmatprep.subr.bf16.mxu0 %v123
    %144 = vmatpush1.bf16.msra.mxu0 %v122
    %145 = vmatprep.subr.bf16.mxu0 0
    %146 = vmatpush1.bf16.msra.mxu0 0
    %147 = vmatprep.subr.bf16.mxu0 0
    %148 = vmatpush1.bf16.msra.mxu0 0
    %149 = vmatprep.subr.bf16.mxu0 0
    %150 = vmatpush1.bf16.msra.mxu0 0
    %151 = vmatprep.subr.bf16.mxu0 0
    %152 = vmatpush1.bf16.msra.mxu0 0
    %153 = vmatprep.subr.bf16.mxu0 0
    %154 = vmatpush1.bf16.msra.mxu0 0
    %155 = vmatprep.subr.bf16.mxu0 0
    %156 = vmatpush1.bf16.msra.mxu0 0
    %157 = vmatprep.subr.bf16.mxu0 0
    %158 = vmatpush1.bf16.msra.mxu0 0
    %159 = vmatprep.subr.bf16.mxu0 0
    %160 = vmatpush1.bf16.msra.mxu0 0
    %161 = vmatprep.subr.bf16.mxu0 0
    %162 = vmatpush1.bf16.msra.mxu0 0
    %163 = vmatprep.subr.bf16.mxu0 0
    %164 = vmatpush1.bf16.msra.mxu0 0
    %165 = vmatprep.subr.bf16.mxu0 0
    %166 = vmatpush1.bf16.msra.mxu0 0
    %167 = vmatprep.subr.bf16.mxu0 0
    %168 = vmatpush1.bf16.msra.mxu0 0
    %169 = vmatprep.subr.bf16.mxu0 0
    %170 = vmatpush1.bf16.msra.mxu0 0
    %171 = vmatprep.subr.bf16.mxu0 0
    %172 = vmatpush1.bf16.msra.mxu0 0
    %173 = vmatprep.mubr.bf16.mxu0 0
    %174 = vmatmul.mubr.bf16.gmra.mrb[0].mxu0 %v136
    %v175 = vpop.f32.mrb[0].mxu0
    %v176 = vadd.f32 0.0, %v175
    %v177 = vpop.f32.mrb[0].mxu0
    %v178 = vadd.f32 0.0, %v177
    %v179 = vpop.f32.mrb[0].mxu0
    %v180 = vadd.f32 0.0, %v179
    %v181 = vpop.f32.mrb[0].mxu0
    %v182 = vadd.f32 0.0, %v181
    %183 = vmatprep.mubr.bf16.mxu0 0
    %184 = vmatmul.mubr.bf16.gmra.mrb[0].mxu0 %v139
    %v185 = vpop.f32.mrb[0].mxu0
    %v186 = vadd.f32 0.0, %v185
    %v187 = vpop.f32.mrb[0].mxu0
    %v188 = vadd.f32 0.0, %v187
    %v189 = vpop.f32.mrb[0].mxu0
    %v190 = vadd.f32 0.0, %v189
    %v191 = vpop.f32.mrb[0].mxu0
    %v192 = vadd.f32 0.0, %v191
    %193 = vdwg.mxu0
    %194 = vmatprep.subr.bf16.mxu0 %v121
    %195 = vmatpush1.bf16.msra.mxu0 %v120
    %196 = vmatprep.subr.bf16.mxu0 %v125
    %197 = vmatpush1.bf16.msra.mxu0 %v124
    %198 = vmatprep.subr.bf16.mxu0 0
    %199 = vmatpush1.bf16.msra.mxu0 0
    %200 = vmatprep.subr.bf16.mxu0 0
    %201 = vmatpush1.bf16.msra.mxu0 0
    %202 = vmatprep.subr.bf16.mxu0 0
    %203 = vmatpush1.bf16.msra.mxu0 0
    %204 = vmatprep.subr.bf16.mxu0 0
    %205 = vmatpush1.bf16.msra.mxu0 0
    %206 = vmatprep.subr.bf16.mxu0 0
    %207 = vmatpush1.bf16.msra.mxu0 0
    %208 = vmatprep.subr.bf16.mxu0 0
    %209 = vmatpush1.bf16.msra.mxu0 0
    %210 = vmatprep.subr.bf16.mxu0 0
    %211 = vmatpush1.bf16.msra.mxu0 0
    %212 = vmatprep.subr.bf16.mxu0 0
    %213 = vmatpush1.bf16.msra.mxu0 0
    %214 = vmatprep.subr.bf16.mxu0 0
    %215 = vmatpush1.bf16.msra.mxu0 0
    %216 = vmatprep.subr.bf16.mxu0 0
    %217 = vmatpush1.bf16.msra.mxu0 0
    %218 = vmatprep.subr.bf16.mxu0 0
    %219 = vmatpush1.bf16.msra.mxu0 0
    %220 = vmatprep.subr.bf16.mxu0 0
    %221 = vmatpush1.bf16.msra.mxu0 0
    %222 = vmatprep.subr.bf16.mxu0 0
    %223 = vmatpush1.bf16.msra.mxu0 0
    %224 = vmatprep.subr.bf16.mxu0 0
    %225 = vmatpush1.bf16.msra.mxu0 0
    %226 = vmatprep.mubr.bf16.mxu0 0
    %227 = vmatmul.mubr.bf16.gmra.mrb[0].mxu0 %v136
    %v228 = vpop.f32.mrb[0].mxu0
    %v229 = vadd.f32 0.0, %v228
    %v230 = vpop.f32.mrb[0].mxu0
    %v231 = vadd.f32 0.0, %v230
    %v232 = vpop.f32.mrb[0].mxu0
    %v233 = vadd.f32 0.0, %v232
    %v234 = vpop.f32.mrb[0].mxu0
    %v235 = vadd.f32 0.0, %v234
    %236 = vmatprep.mubr.bf16.mxu0 0
    %237 = vmatmul.mubr.bf16.gmra.mrb[0].mxu0 %v139
    %v238 = vpop.f32.mrb[0].mxu0
    %v239 = vadd.f32 0.0, %v238
    %v240 = vpop.f32.mrb[0].mxu0
    %v241 = vadd.f32 0.0, %v240
    %v242 = vpop.f32.mrb[0].mxu0
    %v243 = vadd.f32 0.0, %v242
    %v244 = vpop.f32.mrb[0].mxu0
    %v245 = vadd.f32 0.0, %v244
    %246 = vdwg.mxu0
    %v247 = vrot.slane %v178, 1
    %v248 = vrot.slane %v182, 1
    %v249 = vrot.slane %v188, 1
    %v250 = vrot.slane %v192, 1
    %v251 = vlaneseq
    %v252 = vshrl.u32 %v251, 7
    %vm253 = vcmp.lt.s32.totalorder %v252, 7
    %v254 = vsel %vm253, %v249, %v250
    %v255 = vsel %vm253, %v248, %v249
    %v256 = vsel %vm253, %v247, %v248
    %v257 = vsel %vm253, %v250, %v247
    %v258 = vadd.f32 %v176, %v256
    %v259 = vadd.f32 %v180, %v255
    %v260 = vadd.f32 %v186, %v254
    %v261 = vadd.f32 %v190, %v257
    %v262 = vrot.slane %v229, 2
    %v263 = vrot.slane %v233, 2
    %v264 = vrot.slane %v239, 2
    %v265 = vrot.slane %v243, 2
    %vm266 = vcmp.lt.s32.totalorder %v252, 6
    %v267 = vsel %vm266, %v264, %v265
    %v268 = vsel %vm266, %v263, %v264
    %v269 = vsel %vm266, %v262, %v263
    %v270 = vsel %vm266, %v265, %v262
    %v271 = vadd.f32 %v258, %v269
    %v272 = vadd.f32 %v259, %v268
    %v273 = vadd.f32 %v260, %v267
    %v274 = vadd.f32 %v261, %v270
    %v275 = vrot.slane %v231, 3
    %v276 = vrot.slane %v235, 3
    %v277 = vrot.slane %v241, 3
    %v278 = vrot.slane %v245, 3
    %vm279 = vcmp.lt.s32.totalorder %v252, 5
    %v280 = vsel %vm279, %v277, %v278
    %v281 = vsel %vm279, %v276, %v277
    %v282 = vsel %vm279, %v275, %v276
    %v283 = vsel %vm279, %v278, %v275
    %v284 = vadd.f32 %v271, %v282
    %v285 = vadd.f32 %v272, %v281
    %v286 = vadd.f32 %v273, %v280
    %v287 = vadd.f32 %v274, %v283
    %v288 = vld [vmem:[#allocation7] sm:$0xff]
    %v289 = vld [vmem:[#allocation7 + $0x8] sm:$0xff]
    %v290 = vadd.f32 %v284, %v288
    %v291 = vadd.f32 %v285, %v289
    %v292 = vadd.f32 %v286, %v288
    %v293 = vadd.f32 %v287, %v289
    %v294 = vmax.f32 %v290, %v291
    %v295 = vrot.slane %v294, 4
    %v296 = vmax.f32 %v294, %v295
    %v297 = vrot.slane %v296, 2
    %v298 = vmax.f32 %v296, %v297
    %v299 = vrot.slane %v298, 1
    %v300 = vmax.f32 %v298, %v299
    %v301 = vmax.f32 %v292, %v293
    %v302 = vrot.slane %v301, 4
    %v303 = vmax.f32 %v301, %v302
    %v304 = vrot.slane %v303, 2
    %v305 = vmax.f32 %v303, %v304
    %v306 = vrot.slane %v305, 1
    %v307 = vmax.f32 %v305, %v306
    %v308 = vld [vmem:[%s2] sm:$0x1]
    %v310 = vlaneseq
    %v311 = vshrl.u32 %v310, 7
    %v312 = vsub.s32 0, %v311
    %v313 = vrot.slane %v308, %v312
    %v315 = vadd.f32 %v300, %v313
    %v316 = vadd.f32 %v307, %v313
    %v317 = vmax.f32 %v315, 0.0
    %v318 = vmax.f32 %v316, 0.0
    %v319 = vld [vmem:[#allocation8] sm:$0xff]
    %v320 = vld [vmem:[#allocation8 + $0x8] sm:$0xff]
    %v321 = vld [vmem:[#allocation8 + $0x10] sm:$0xff]
    %v322 = vld [vmem:[#allocation8 + $0x18] sm:$0xff]
    %v323 = vld [vmem:[#allocation8 + $0x20] sm:$0xff]
    %v324 = vld [vmem:[#allocation8 + $0x28] sm:$0xff]
    %v325 = vld [vmem:[#allocation8 + $0x30] sm:$0xff]
    %v326 = vld [vmem:[#allocation8 + $0x38] sm:$0xff]
    %v327 = vld [vmem:[#allocation8 + $0x40] sm:$0xff]
    %v328 = vld [vmem:[#allocation8 + $0x48] sm:$0xff]
    %v329 = vld [vmem:[#allocation8 + $0x50] sm:$0xff]
    %v330 = vld [vmem:[#allocation8 + $0x58] sm:$0xff]
    %v331 = vld [vmem:[#allocation8 + $0x60] sm:$0xff]
    %v332 = vld [vmem:[#allocation8 + $0x68] sm:$0xff]
    %v333 = vld [vmem:[#allocation8 + $0x70] sm:$0xff]
    %v334 = vld [vmem:[#allocation8 + $0x78] sm:$0xff]
    %v335 = vld [vmem:[%s5] sm:$0x1]
    %v337 = vlaneseq
    %v338 = vshrl.u32 %v337, 7
    %v339 = vsub.s32 0, %v338
    %v340 = vrot.slane %v335, %v339
    %v344 = vrot.slane %v318, 7
    %vm345 = vcmask 1041409
    %v346 = vsel %vm345, %v344, %v317
    %348 = vmatprep.subr.mxu0 0.0
    %349 = vmatpush1.msra.mxu0 %v319
    %350 = vmatprep.subr.mxu0 0.0
    %351 = vmatpush1.msra.mxu0 %v320
    %352 = vmatprep.subr.mxu0 0.0
    %353 = vmatpush1.msra.mxu0 %v321
    %354 = vmatprep.subr.mxu0 0.0
    %355 = vmatpush1.msra.mxu0 %v322
    %356 = vmatprep.subr.mxu0 0.0
    %357 = vmatpush1.msra.mxu0 %v323
    %358 = vmatprep.subr.mxu0 0.0
    %359 = vmatpush1.msra.mxu0 %v324
    %360 = vmatprep.subr.mxu0 0.0
    %361 = vmatpush1.msra.mxu0 %v325
    %362 = vmatprep.subr.mxu0 0.0
    %363 = vmatpush1.msra.mxu0 %v326
    %364 = vmatprep.subr.mxu0 0.0
    %365 = vmatpush1.msra.mxu0 %v327
    %366 = vmatprep.subr.mxu0 0.0
    %367 = vmatpush1.msra.mxu0 %v328
    %368 = vmatprep.subr.mxu0 0.0
    %369 = vmatpush1.msra.mxu0 %v329
    %370 = vmatprep.subr.mxu0 0.0
    %371 = vmatpush1.msra.mxu0 %v330
    %372 = vmatprep.subr.mxu0 0.0
    %373 = vmatpush1.msra.mxu0 %v331
    %374 = vmatprep.subr.mxu0 0.0
    %375 = vmatpush1.msra.mxu0 %v332
    %376 = vmatprep.subr.mxu0 0.0
    %377 = vmatpush1.msra.mxu0 %v333
    %378 = vmatprep.subr.mxu0 0.0
    %379 = vmatpush1.msra.mxu0 %v334
    %380 = vmatprep.subr.mxu0 0.0
    %381 = vmatpush1.msra.mxu0 0.0
    %382 = vmatprep.subr.mxu0 0.0
    %383 = vmatpush1.msra.mxu0 0.0
    %384 = vmatprep.subr.mxu0 0.0
    %385 = vmatpush1.msra.mxu0 0.0
    %386 = vmatprep.subr.mxu0 0.0
    %387 = vmatpush1.msra.mxu0 0.0
    %388 = vmatprep.subr.mxu0 0.0
    %389 = vmatpush1.msra.mxu0 0.0
    %390 = vmatprep.subr.mxu0 0.0
    %391 = vmatpush1.msra.mxu0 0.0
    %392 = vmatprep.subr.mxu0 0.0
    %393 = vmatpush1.msra.mxu0 0.0
    %394 = vmatprep.subr.mxu0 0.0
    %395 = vmatpush1.msra.mxu0 0.0
    %396 = vmatprep.subr.mxu0 0.0
    %397 = vmatpush1.msra.mxu0 0.0
    %398 = vmatprep.subr.mxu0 0.0
    %399 = vmatpush1.msra.mxu0 0.0
    %400 = vmatprep.subr.mxu0 0.0
    %401 = vmatpush1.msra.mxu0 0.0
    %402 = vmatprep.subr.mxu0 0.0
    %403 = vmatpush1.msra.mxu0 0.0
    %404 = vmatprep.subr.mxu0 0.0
    %405 = vmatpush1.msra.mxu0 0.0
    %406 = vmatprep.subr.mxu0 0.0
    %407 = vmatpush1.msra.mxu0 0.0
    %408 = vmatprep.subr.mxu0 0.0
    %409 = vmatpush1.msra.mxu0 0.0
    %410 = vmatprep.subr.mxu0 0.0
    %411 = vmatpush1.msra.mxu0 0.0
    %412 = vmatprep.mubr.f32.mxu0 0.0
    %413 = vmatmul.mubr.f32.gmra.mrb[0].mxu0 %v346
    %v414 = vpop.f32.mrb[0].mxu0
    %v415 = vadd.f32 %v340, %v414
    %v416 = vpop.f32.mrb[0].mxu0
    %417 = vdwg.mxu0
    %v418 = vsub.f32 0.0, %v415
    %v419 = vmul.f32 %v418, 1.442695
    %v420 = vpow.pop %v419
    %v421 = vadd.f32 %v420, 1.0
    %v422 = vrcp.pop %v421
    %423 = vst [vmem:[#allocation10] sm:$0x3] %v422
    // Predicated region
    $region42: #{tpu_custom_call.1} parent=1 // pred_check
      _
    $region43: #{tpu_custom_call.1} parent=1 // pred_check_branch
      %425 = sbr.rel (0) target = $region45
    $region44: #{tpu_custom_call.1} parent=1 // pred_region
      %s427 = ssub.s32 32, 32
      %428 = vsyncadd [#allocation4], %s427
      %s430 = sshll.u32 [#allocation10], 4
      %s431 = int_to_ptr.vmem [resolvable:$true] %s430
      %433 = dma.vmem_to_hbm [thread:$0]  %s431, 32, %s6, [#allocation4]
    $region45: #{tpu_custom_call.1} parent=1 // pred_fallthru
      _
    // Predicated region
    $region46: #{tpu_custom_call.1} parent=1 // pred_check
      _
    $region47: #{tpu_custom_call.1} parent=1 // pred_check_branch
      %435 = sbr.rel (0) target = $region49
    $region48: #{tpu_custom_call.1} parent=1 // pred_region
      %436 = dma.done [#allocation4], 32
    $region49: #{tpu_custom_call.1} parent=1 // pred_fallthru
      _
    %437 = vsyncpa [#allocation3], 1
    %438 = vsyncpa [#allocation6], 1
    %439 = vsyncpa [#allocation9], 1
    %440 = vsyncpa [#allocation4], 1

</llo_original>
